<compile_context>
chip_gen: v7x
topology: tpu7x:2x2x1
jax: 0.10.0
libtpu: 0.0.40
codegen_flags: <defaults>
</compile_context>

<pallas_src>
import functools

import numpy as np
import jax
import jax.numpy as jnp
from jax.experimental import pallas as pl
from jax.experimental.pallas import tpu as pltpu


def _leaky_relu(x, slope=0.2):
    return jnp.where(x > 0, x, slope * x)


def feedback_kernel(x_ref, w1_ref, b1_ref, w2_ref, b2_ref, h_ref):
    # fc1: MXU matmul with f32 accumulate; bias + LeakyReLU stay in f32 on VPU.
    x = x_ref[...]
    z1 = jnp.dot(x, w1_ref[...], preferred_element_type=jnp.float32) + b1_ref[...]
    x1 = _leaky_relu(z1)
    # fc2: cast the f32 intermediate back to the MXU dtype for the second matmul.
    z2 = (
        jnp.dot(x1.astype(w2_ref.dtype), w2_ref[...],
                preferred_element_type=jnp.float32)
        + b2_ref[...]
    )
    h_ref[...] = _leaky_relu(z2).astype(h_ref.dtype)
    # TODO(synk): for large ngh (MXU-bound), split the row tile with a short
    # unrolled fori_loop so fc2 of chunk i overlaps the epilogue/fc1 of chunk i+1.


def prepare_feedback_params(w1, b1, w2, b2, *, mxu_dtype=jnp.bfloat16, lane=None):
    """One-time prep: zero-pad to a lane-dense feature axis and cast to the MXU
    dtype. Do this at param-init / checkpoint-load time, NOT per forward call.

    Zero-padding is exact for this network: LeakyReLU(0)=0 and padded weight
    rows/cols and biases are 0, so padded lanes stay 0 through both layers.
    """
    H = w1.shape[0]
    if lane is None:
        # 256-aligned features keep the 2x256x256 MXU (v6e/v7x) full for big
        # ngh; 128 is enough (and exact) when ngh <= 128.
        lane = 128 if H <= 128 else 256
    Hp = lane * pl.cdiv(H, lane)
    ph = Hp - H
    w1p = jnp.pad(w1, ((0, ph), (0, ph))).astype(mxu_dtype)
    w2p = jnp.pad(w2, ((0, ph), (0, ph))).astype(mxu_dtype)
    b1p = jnp.pad(jnp.reshape(b1, (1, H)), ((0, 0), (0, ph))).astype(jnp.float32)
    b2p = jnp.pad(jnp.reshape(b2, (1, H)), ((0, 0), (0, ph))).astype(jnp.float32)
    return {"w1": w1p, "b1": b1p, "w2": w2p, "b2": b2p,
            "H": H, "Hp": Hp, "mxu_dtype": mxu_dtype}


def _num_tensorcores_per_chip():
    # v7x-class chips have 2 TensorCores sharing the grid via megacore;
    # v5e/v6e have 1. Fallback to 1 if detection fails.
    try:
        kind = jax.devices()[0].device_kind.lower()
        if "v7" in kind:
            return 2
    except Exception:
        pass
    return 1


def feedback_forward_prepared(x, params, *, tb=512, out_dtype=None):
    """Hot path. x: [B, ngh] (or already-padded [Bp, Hp] in the MXU dtype)."""
    H, Hp = params["H"], params["Hp"]
    mxu_dtype = params["mxu_dtype"]
    w1p, b1p, w2p, b2p = params["w1"], params["b1"], params["w2"], params["b2"]
    B = x.shape[0]
    if out_dtype is None:
        out_dtype = x.dtype  # pass jnp.bfloat16 to halve output writeback

    # --- row-tile selection: big tiles (fewer grid steps), but keep >= 2 tiles
    # on 2-TC chips so the "parallel" batch axis uses both TensorCores. -------
    tb = max(8, min(tb, 8 * pl.cdiv(B, 8)))
    n_cores = _num_tensorcores_per_chip()
    if n_cores > 1 and pl.cdiv(B, tb) < n_cores and B >= 8 * n_cores:
        tb = 8 * pl.cdiv(pl.cdiv(B, n_cores), 8)
    Bp = tb * pl.cdiv(B, tb)

    # --- activation pad/cast (skipped entirely when x is already padded bf16,
    # e.g. when stacking layers in the padded layout). -----------------------
    needs_pad = (Bp != B) or (x.shape[1] != Hp) or (x.dtype != mxu_dtype)
    if needs_pad:
        xp = jnp.pad(x, ((0, Bp - B), (0, Hp - x.shape[1]))).astype(mxu_dtype)
    else:
        xp = x

    w_bytes = np.dtype(mxu_dtype).itemsize
    o_bytes = np.dtype(out_dtype).itemsize

    # Explicit VMEM budget: double-buffered in/out row tiles + (conservatively
    # 2x) resident weights/biases + headroom. Keeps the weight-resident fast
    # path working past v5e's 16 MiB / v6e-v7x's 32 MiB default scoped limits.
    vmem_needed = (2 * tb * Hp * w_bytes
                   + 2 * tb * Hp * o_bytes
                   + 2 * 2 * Hp * Hp * w_bytes
                   + 2 * 2 * Hp * 4)
    vmem_limit = int(min(128 << 20, max(32 << 20, 1.25 * vmem_needed + (2 << 20))))
    # TODO(synk): once 2*Hp^2 bf16 weights approach the per-TC VMEM (~>=4096 on
    # v7x's 64 MiB, ~>=6-8k on v5e/v6e), switch to a tiled (M,N,K) grid with an
    # f32 accumulator scratch instead of the weight-resident strategy, and use
    # pipeline_mode=pl.Buffered(1) on the resident specs to drop dead buffers.

    cost = pl.CostEstimate(
        flops=2 * 2 * Bp * Hp * Hp,            # two Hp x Hp matmuls over Bp rows
        transcendentals=0,
        bytes_accessed=(Bp * Hp * (w_bytes + o_bytes)
                        + 2 * Hp * Hp * w_bytes + 2 * Hp * 4),
    )

    vmem = pltpu.MemorySpace.VMEM
    row_spec = pl.BlockSpec((tb, Hp), lambda i: (i, 0), memory_space=vmem)
    # Constant block index across the grid -> weights/biases stay VMEM-resident.
    resident = lambda shape: pl.BlockSpec(shape, lambda i: (0, 0), memory_space=vmem)

    out = pl.pallas_call(
        feedback_kernel,
        out_shape=jax.ShapeDtypeStruct((Bp, Hp), out_dtype),
        grid_spec=pl.GridSpec(
            grid=(Bp // tb,),
            in_specs=[
                row_spec,             # x rows
                resident((Hp, Hp)),   # w1
                resident((1, Hp)),    # b1
                resident((Hp, Hp)),   # w2
                resident((1, Hp)),    # b2
            ],
            out_specs=row_spec,
        ),
        compiler_params=pltpu.CompilerParams(
            dimension_semantics=("parallel",),
            vmem_limit_bytes=vmem_limit,
        ),
        cost_estimate=cost,
    )(xp, w1p, b1p, w2p, b2p)

    if needs_pad:
        out = out[:B, :H]
    return out


def feedback_forward(x, w1, b1, w2, b2, *, tb=512, mxu_dtype=jnp.bfloat16,
                     out_dtype=None):
    """Convenience wrapper (preps params per call; prefer prepare_* + *_prepared)."""
    params = prepare_feedback_params(w1, b1, w2, b2, mxu_dtype=mxu_dtype)
    return feedback_forward_prepared(x, params, tb=tb, out_dtype=out_dtype)


def init_feedback_params(key, ngh, dtype=jnp.float32):
    # weights_init: Linear.weight ~ N(0, 0.02), Linear.bias = 0
    k1, k2 = jax.random.split(key)
    w1 = (0.02 * jax.random.normal(k1, (ngh, ngh))).astype(dtype)
    b1 = jnp.zeros((1, ngh), dtype)
    w2 = (0.02 * jax.random.normal(k2, (ngh, ngh))).astype(dtype)
    b2 = jnp.zeros((1, ngh), dtype)
    return w1, b1, w2, b2


if __name__ == "__main__":
    key = jax.random.PRNGKey(0)
    k_x, k_p = jax.random.split(key)

    ngh = 32      # opt.ngh
    batch = 256   # batched rows so the MXU / grid path is actually exercised

    x = jax.random.normal(k_x, (batch, ngh), dtype=jnp.float32)
    w1, b1, w2, b2 = init_feedback_params(k_p, ngh)

    # One-time prep of padded bf16 weights/biases, OUTSIDE the hot path.
    params = prepare_feedback_params(w1, b1, w2, b2)
    fwd = jax.jit(functools.partial(feedback_forward_prepared, params=params))

    h = fwd(x)
    jax.block_until_ready(h)

    # f32 reference (kernel uses bf16 MXU operands -> loosened tolerance).
    def ref(x):
        z1 = x @ w1 + b1
        x1 = jnp.where(z1 > 0, z1, 0.2 * z1)
        z2 = x1 @ w2 + b2
        return jnp.where(z2 > 0, z2, 0.2 * z2)

    assert h.shape == (batch, ngh)
    assert jnp.allclose(h, ref(x), atol=5e-3, rtol=5e-2), "mismatch vs reference"
    print("KERNEL_OK")
</pallas_src>

<mosaic_0001>
module attributes {stable_mosaic.version = 11 : i64} {
  func.func @feedback_kernel(%arg0: i32, %arg1: memref<256x128xbf16, #tpu.memory_space<vmem>>, %arg2: memref<128x128xbf16, #tpu.memory_space<vmem>>, %arg3: memref<1x128xf32, #tpu.memory_space<vmem>>, %arg4: memref<128x128xbf16, #tpu.memory_space<vmem>>, %arg5: memref<1x128xf32, #tpu.memory_space<vmem>>, %arg6: memref<256x128xf32, #tpu.memory_space<vmem>>) attributes {dimension_semantics = [#tpu.dimension_semantics<parallel>], iteration_bounds = array<i64: 1>, scalar_prefetch = 0 : i64, scratch_operands = 0 : i64, tpu.core_type = #tpu.core_type<tc>, window_params = [{transform_indices = @transform_0, window_bounds = array<i64: 256, 128>}, {pipeline_mode = #tpu.pipeline_mode<synchronous>, transform_indices = @transform_1, window_bounds = array<i64: 128, 128>}, {pipeline_mode = #tpu.pipeline_mode<synchronous>, transform_indices = @transform_2, window_bounds = array<i64: 1, 128>}, {pipeline_mode = #tpu.pipeline_mode<synchronous>, transform_indices = @transform_3, window_bounds = array<i64: 128, 128>}, {pipeline_mode = #tpu.pipeline_mode<synchronous>, transform_indices = @transform_4, window_bounds = array<i64: 1, 128>}, {transform_indices = @transform_5, window_bounds = array<i64: 256, 128>}]} {
    %c0 = arith.constant 0 : index
    %c0_0 = arith.constant 0 : index
    %0 = vector.load %arg1[%c0, %c0_0] : memref<256x128xbf16, #tpu.memory_space<vmem>>, vector<256x128xbf16>
    %c0_1 = arith.constant 0 : index
    %c0_2 = arith.constant 0 : index
    %1 = vector.load %arg2[%c0_1, %c0_2] : memref<128x128xbf16, #tpu.memory_space<vmem>>, vector<128x128xbf16>
    %cst = arith.constant dense<0.000000e+00> : vector<256x128xf32>
    %2 = tpu.matmul %0, %1, %cst {dimension_numbers = #tpu.dot_dimension_numbers<[1], [0], [0], [1], [0, 0, 1, 1], [], []>} : vector<256x128xbf16>, vector<128x128xbf16>, vector<256x128xf32> -> vector<256x128xf32>
    %c0_3 = arith.constant 0 : index
    %c0_4 = arith.constant 0 : index
    %3 = vector.load %arg3[%c0_3, %c0_4] : memref<1x128xf32, #tpu.memory_space<vmem>>, vector<1x128xf32>
    %4 = vector.broadcast %3 : vector<1x128xf32> to vector<256x128xf32>
    %5 = arith.addf %2, %4 : vector<256x128xf32>
    %cst_5 = arith.constant 0.000000e+00 : f32
    %6 = vector.broadcast %cst_5 : f32 to vector<256x128xf32>
    %7 = arith.cmpf ogt, %5, %6 : vector<256x128xf32>
    %cst_6 = arith.constant 2.000000e-01 : f32
    %8 = vector.broadcast %cst_6 : f32 to vector<256x128xf32>
    %9 = arith.mulf %8, %5 : vector<256x128xf32>
    %10 = arith.select %7, %5, %9 : vector<256x128xi1>, vector<256x128xf32>
    %11 = arith.truncf %10 : vector<256x128xf32> to vector<256x128xbf16>
    %c0_7 = arith.constant 0 : index
    %c0_8 = arith.constant 0 : index
    %12 = vector.load %arg4[%c0_7, %c0_8] : memref<128x128xbf16, #tpu.memory_space<vmem>>, vector<128x128xbf16>
    %cst_9 = arith.constant dense<0.000000e+00> : vector<256x128xf32>
    %13 = tpu.matmul %11, %12, %cst_9 {dimension_numbers = #tpu.dot_dimension_numbers<[1], [0], [0], [1], [0, 0, 1, 1], [], []>} : vector<256x128xbf16>, vector<128x128xbf16>, vector<256x128xf32> -> vector<256x128xf32>
    %c0_10 = arith.constant 0 : index
    %c0_11 = arith.constant 0 : index
    %14 = vector.load %arg5[%c0_10, %c0_11] : memref<1x128xf32, #tpu.memory_space<vmem>>, vector<1x128xf32>
    %15 = vector.broadcast %14 : vector<1x128xf32> to vector<256x128xf32>
    %16 = arith.addf %13, %15 : vector<256x128xf32>
    %cst_12 = arith.constant 0.000000e+00 : f32
    %17 = vector.broadcast %cst_12 : f32 to vector<256x128xf32>
    %18 = arith.cmpf ogt, %16, %17 : vector<256x128xf32>
    %cst_13 = arith.constant 2.000000e-01 : f32
    %19 = vector.broadcast %cst_13 : f32 to vector<256x128xf32>
    %20 = arith.mulf %19, %16 : vector<256x128xf32>
    %21 = arith.select %18, %16, %20 : vector<256x128xi1>, vector<256x128xf32>
    %c0_14 = arith.constant 0 : index
    %c0_15 = arith.constant 0 : index
    %22 = vector.load %arg6[%c0_14, %c0_15] : memref<256x128xf32, #tpu.memory_space<vmem>>, vector<256x128xf32>
    tpu.vector_store %arg6[%c0_14, %c0_15], %21 {strides = array<i32>} : memref<256x128xf32, #tpu.memory_space<vmem>>, vector<256x128xf32>,
    return
  }
  func.func @transform_0(%arg0: i32) -> (i32, i32) {
    %c0_i32 = arith.constant 0 : i32
    %c0_i32_0 = arith.constant 0 : i32
    return %arg0, %c0_i32 : i32, i32
  }
  func.func @transform_1(%arg0: i32) -> (i32, i32) {
    %c0_i32 = arith.constant 0 : i32
    %c0_i32_0 = arith.constant 0 : i32
    %c0_i32_1 = arith.constant 0 : i32
    return %c0_i32, %c0_i32_0 : i32, i32
  }
  func.func @transform_2(%arg0: i32) -> (i32, i32) {
    %c0_i32 = arith.constant 0 : i32
    %c0_i32_0 = arith.constant 0 : i32
    %c0_i32_1 = arith.constant 0 : i32
    return %c0_i32, %c0_i32_0 : i32, i32
  }
  func.func @transform_3(%arg0: i32) -> (i32, i32) {
    %c0_i32 = arith.constant 0 : i32
    %c0_i32_0 = arith.constant 0 : i32
    %c0_i32_1 = arith.constant 0 : i32
    return %c0_i32, %c0_i32_0 : i32, i32
  }
  func.func @transform_4(%arg0: i32) -> (i32, i32) {
    %c0_i32 = arith.constant 0 : i32
    %c0_i32_0 = arith.constant 0 : i32
    %c0_i32_1 = arith.constant 0 : i32
    return %c0_i32, %c0_i32_0 : i32, i32
  }
  func.func @transform_5(%arg0: i32) -> (i32, i32) {
    %c0_i32 = arith.constant 0 : i32
    %c0_i32_0 = arith.constant 0 : i32
    return %arg0, %c0_i32 : i32, i32
  }
}

</mosaic_0001>

<llo_original>
// kernel: feedback_forward_prepared.1
$region0: #{feedback_forward_prepared.1}
  #allocation0 [shape = 'u32[]', space=smem, size = 0x4, offset = 0x4, fixed_abs, tag = 'smem constant byte address 0x4 - core index']
  #allocation1 [shape = 'u32[144,128]{1,0:T(1,128)}', space=vmem, size = 0x12000, scoped, tag = 'internal scratch']
  %s0 = inlined_call_operand.vmem [shape: bf16[256,128], index: 0, kind: input, shape index: {}]
  %s1 = inlined_call_operand.vmem [shape: bf16[128,128], index: 1, kind: input, shape index: {}]
  %s2 = inlined_call_operand.vmem [shape: f32[1,128], index: 2, kind: input, shape index: {}, may-alias: {2,4}]
  %s3 = inlined_call_operand.vmem [shape: bf16[128,128], index: 3, kind: input, shape index: {}]
  %s4 = inlined_call_operand.vmem [shape: f32[1,128], index: 4, kind: input, shape index: {}, may-alias: {2,4}]
  %s5 = inlined_call_operand.vmem [shape: f32[256,128], index: 5, kind: output, shape index: {}]
  %s6 = sld [smem:[#allocation0]]
  $region30: #{feedback_forward_prepared.1} parent=0
    _
  %s8 = ssub.s32 1, %s6
  %s9 = scalar_select 0, %s8, %s6
  // Predicated region
  $region2: #{feedback_forward_prepared.1} parent=0 // pred_check
    _
  $region3: #{feedback_forward_prepared.1} parent=0 // pred_check_branch
    %11 = sbr.rel (0) target = $region5
  $region4: #{feedback_forward_prepared.1} parent=0 // pred_region
    _
  $region5: #{feedback_forward_prepared.1} parent=0 // pred_fallthru
    _
  // Predicated region
  $region6: #{feedback_forward_prepared.1} parent=0 // pred_check
    _
  $region7: #{feedback_forward_prepared.1} parent=0 // pred_check_branch
    %13 = sbr.rel (0) target = $region9
  $region8: #{feedback_forward_prepared.1} parent=0 // pred_region
    _
  $region9: #{feedback_forward_prepared.1} parent=0 // pred_fallthru
    _
  // Predicated region
  $region10: #{feedback_forward_prepared.1} parent=0 // pred_check
    _
  $region11: #{feedback_forward_prepared.1} parent=0 // pred_check_branch
    %15 = sbr.rel (0) target = $region13
  $region12: #{feedback_forward_prepared.1} parent=0 // pred_region
    _
  $region13: #{feedback_forward_prepared.1} parent=0 // pred_fallthru
    _
  // Predicated region
  $region14: #{feedback_forward_prepared.1} parent=0 // pred_check
    _
  $region15: #{feedback_forward_prepared.1} parent=0 // pred_check_branch
    %17 = sbr.rel (0) target = $region17
  $region16: #{feedback_forward_prepared.1} parent=0 // pred_region
    _
  $region17: #{feedback_forward_prepared.1} parent=0 // pred_fallthru
    _
  // Predicated region
  $region18: #{feedback_forward_prepared.1} parent=0 // pred_check
    _
  $region19: #{feedback_forward_prepared.1} parent=0 // pred_check_branch
    %19 = sbr.rel (0) target = $region21
  $region20: #{feedback_forward_prepared.1} parent=0 // pred_region
    _
  $region21: #{feedback_forward_prepared.1} parent=0 // pred_fallthru
    _
  %v21 = vld [vmem:[%s0] sm:$0xf]
  %v22 = vld [vmem:[%s0 + $0x4] sm:$0xf]
  %v23 = vld [vmem:[%s0 + $0x8] sm:$0xf]
  %v24 = vld [vmem:[%s0 + $0xc] sm:$0xf]
  %v25 = vld [vmem:[%s0 + $0x10] sm:$0xf]
  %v26 = vld [vmem:[%s0 + $0x14] sm:$0xf]
  %v27 = vld [vmem:[%s0 + $0x18] sm:$0xf]
  %v28 = vld [vmem:[%s0 + $0x1c] sm:$0xf]
  %v29 = vld [vmem:[%s0 + $0x20] sm:$0xf]
  %v30 = vld [vmem:[%s0 + $0x24] sm:$0xf]
  %v31 = vld [vmem:[%s0 + $0x28] sm:$0xf]
  %v32 = vld [vmem:[%s0 + $0x2c] sm:$0xf]
  %v33 = vld [vmem:[%s0 + $0x30] sm:$0xf]
  %v34 = vld [vmem:[%s0 + $0x34] sm:$0xf]
  %v35 = vld [vmem:[%s0 + $0x38] sm:$0xf]
  %v36 = vld [vmem:[%s0 + $0x3c] sm:$0xf]
  %v37 = vld [vmem:[%s0 + $0x40] sm:$0xf]
  %v38 = vld [vmem:[%s0 + $0x44] sm:$0xf]
  %v39 = vld [vmem:[%s0 + $0x48] sm:$0xf]
  %v40 = vld [vmem:[%s0 + $0x4c] sm:$0xf]
  %v41 = vld [vmem:[%s0 + $0x50] sm:$0xf]
  %v42 = vld [vmem:[%s0 + $0x54] sm:$0xf]
  %v43 = vld [vmem:[%s0 + $0x58] sm:$0xf]
  %v44 = vld [vmem:[%s0 + $0x5c] sm:$0xf]
  %v45 = vld [vmem:[%s0 + $0x60] sm:$0xf]
  %v46 = vld [vmem:[%s0 + $0x64] sm:$0xf]
  %v47 = vld [vmem:[%s0 + $0x68] sm:$0xf]
  %v48 = vld [vmem:[%s0 + $0x6c] sm:$0xf]
  %v49 = vld [vmem:[%s0 + $0x70] sm:$0xf]
  %v50 = vld [vmem:[%s0 + $0x74] sm:$0xf]
  %v51 = vld [vmem:[%s0 + $0x78] sm:$0xf]
  %v52 = vld [vmem:[%s0 + $0x7c] sm:$0xf]
  %v53 = vld [vmem:[%s1] sm:$0xf]
  %v54 = vld [vmem:[%s1 + $0x4] sm:$0xf]
  %v55 = vld [vmem:[%s1 + $0x8] sm:$0xf]
  %v56 = vld [vmem:[%s1 + $0xc] sm:$0xf]
  %v57 = vld [vmem:[%s1 + $0x10] sm:$0xf]
  %v58 = vld [vmem:[%s1 + $0x14] sm:$0xf]
  %v59 = vld [vmem:[%s1 + $0x18] sm:$0xf]
  %v60 = vld [vmem:[%s1 + $0x1c] sm:$0xf]
  %v61 = vld [vmem:[%s1 + $0x20] sm:$0xf]
  %v62 = vld [vmem:[%s1 + $0x24] sm:$0xf]
  %v63 = vld [vmem:[%s1 + $0x28] sm:$0xf]
  %v64 = vld [vmem:[%s1 + $0x2c] sm:$0xf]
  %v65 = vld [vmem:[%s1 + $0x30] sm:$0xf]
  %v66 = vld [vmem:[%s1 + $0x34] sm:$0xf]
  %v67 = vld [vmem:[%s1 + $0x38] sm:$0xf]
  %v68 = vld [vmem:[%s1 + $0x3c] sm:$0xf]
  %v69 = vld [vmem:[%s2] sm:$0x1]
  %v71 = vlaneseq
  %v72 = vshrl.u32 %v71, 7
  %v73 = vsub.s32 0, %v72
  %v74 = vrot.slane %v69, %v73
  %v108 = vunpack.c.l.b16 %v21
  %v109 = vunpack.c.l.b16 %v22
  %v110 = vunpack.c.l.b16 %v23
  %v111 = vunpack.c.l.b16 %v24
  %v112 = vunpack.c.l.b16 %v25
  %v113 = vunpack.c.l.b16 %v26
  %v114 = vunpack.c.l.b16 %v27
  %v115 = vunpack.c.l.b16 %v28
  %v116 = vunpack.c.l.b16 %v29
  %v117 = vunpack.c.l.b16 %v30
  %v118 = vunpack.c.l.b16 %v31
  %v119 = vunpack.c.l.b16 %v32
  %v120 = vunpack.c.l.b16 %v33
  %v121 = vunpack.c.l.b16 %v34
  %v122 = vunpack.c.l.b16 %v35
  %v123 = vunpack.c.l.b16 %v36
  %v124 = vunpack.c.l.b16 %v37
  %v125 = vunpack.c.l.b16 %v38
  %v126 = vunpack.c.l.b16 %v39
  %v127 = vunpack.c.l.b16 %v40
  %v128 = vunpack.c.l.b16 %v41
  %v129 = vunpack.c.l.b16 %v42
  %v130 = vunpack.c.l.b16 %v43
  %v131 = vunpack.c.l.b16 %v44
  %v132 = vunpack.c.l.b16 %v45
  %v133 = vunpack.c.l.b16 %v46
  %v134 = vunpack.c.l.b16 %v47
  %v135 = vunpack.c.l.b16 %v48
  %v136 = vunpack.c.l.b16 %v49
  %v137 = vunpack.c.l.b16 %v50
  %v138 = vunpack.c.l.b16 %v51
  %v139 = vunpack.c.l.b16 %v52
  %v140 = vpack.c.b16 %v109, %v108
  %v141 = vpack.c.b16 %v111, %v110
  %v142 = vpack.c.b16 %v113, %v112
  %v143 = vpack.c.b16 %v115, %v114
  %v144 = vpack.c.b16 %v117, %v116
  %v145 = vpack.c.b16 %v119, %v118
  %v146 = vpack.c.b16 %v121, %v120
  %v147 = vpack.c.b16 %v123, %v122
  %v148 = vpack.c.b16 %v125, %v124
  %v149 = vpack.c.b16 %v127, %v126
  %v150 = vpack.c.b16 %v129, %v128
  %v151 = vpack.c.b16 %v131, %v130
  %v152 = vpack.c.b16 %v133, %v132
  %v153 = vpack.c.b16 %v135, %v134
  %v154 = vpack.c.b16 %v137, %v136
  %v155 = vpack.c.b16 %v139, %v138
  %v188 = vunpack.c.l.b16 %v53
  %v189 = vunpack.c.l.b16 %v54
  %v190 = vunpack.c.l.b16 %v55
  %v191 = vunpack.c.l.b16 %v56
  %v192 = vunpack.c.l.b16 %v57
  %v193 = vunpack.c.l.b16 %v58
  %v194 = vunpack.c.l.b16 %v59
  %v195 = vunpack.c.l.b16 %v60
  %v196 = vunpack.c.l.b16 %v61
  %v197 = vunpack.c.l.b16 %v62
  %v198 = vunpack.c.l.b16 %v63
  %v199 = vunpack.c.l.b16 %v64
  %v200 = vunpack.c.l.b16 %v65
  %v201 = vunpack.c.l.b16 %v66
  %v202 = vunpack.c.l.b16 %v67
  %v203 = vunpack.c.l.b16 %v68
  %v204 = vpack.c.b16 %v189, %v188
  %v205 = vpack.c.b16 %v191, %v190
  %v206 = vpack.c.b16 %v193, %v192
  %v207 = vpack.c.b16 %v195, %v194
  %v208 = vpack.c.b16 %v197, %v196
  %v209 = vpack.c.b16 %v199, %v198
  %v210 = vpack.c.b16 %v201, %v200
  %v211 = vpack.c.b16 %v203, %v202
  %220 = vmatprep.subr.bf16.mxu0 0
  %221 = vmatpush1.bf16.msra.mxu0 %v204
  %222 = vmatprep.subr.bf16.mxu0 0
  %223 = vmatpush1.bf16.msra.mxu0 %v205
  %224 = vmatprep.subr.bf16.mxu0 0
  %225 = vmatpush1.bf16.msra.mxu0 %v206
  %226 = vmatprep.subr.bf16.mxu0 0
  %227 = vmatpush1.bf16.msra.mxu0 %v207
  %228 = vmatprep.subr.bf16.mxu0 0
  %229 = vmatpush1.bf16.msra.mxu0 %v208
  %230 = vmatprep.subr.bf16.mxu0 0
  %231 = vmatpush1.bf16.msra.mxu0 %v209
  %232 = vmatprep.subr.bf16.mxu0 0
  %233 = vmatpush1.bf16.msra.mxu0 %v210
  %234 = vmatprep.subr.bf16.mxu0 0
  %235 = vmatpush1.bf16.msra.mxu0 %v211
  %236 = vmatprep.subr.bf16.mxu0 0
  %237 = vmatpush1.bf16.msra.mxu0 0
  %238 = vmatprep.subr.bf16.mxu0 0
  %239 = vmatpush1.bf16.msra.mxu0 0
  %240 = vmatprep.subr.bf16.mxu0 0
  %241 = vmatpush1.bf16.msra.mxu0 0
  %242 = vmatprep.subr.bf16.mxu0 0
  %243 = vmatpush1.bf16.msra.mxu0 0
  %244 = vmatprep.subr.bf16.mxu0 0
  %245 = vmatpush1.bf16.msra.mxu0 0
  %246 = vmatprep.subr.bf16.mxu0 0
  %247 = vmatpush1.bf16.msra.mxu0 0
  %248 = vmatprep.subr.bf16.mxu0 0
  %249 = vmatpush1.bf16.msra.mxu0 0
  %250 = vmatprep.subr.bf16.mxu0 0
  %251 = vmatpush1.bf16.msra.mxu0 0
  %252 = vmatprep.mubr.bf16.mxu0 0
  %253 = vmatmul.mubr.bf16.gmra.mrb[0].mxu0 %v140
  %v254 = vpop.f32.mrb[0].mxu0
  %v255 = vadd.f32 %v74, %v254
  %v256 = vpop.f32.mrb[0].mxu0
  %v257 = vpop.f32.mrb[0].mxu0
  %v258 = vadd.f32 %v74, %v257
  %v259 = vpop.f32.mrb[0].mxu0
  %260 = vmatprep.mubr.bf16.mxu0 0
  %261 = vmatmul.mubr.bf16.gmra.mrb[0].mxu0 %v141
  %v262 = vpop.f32.mrb[0].mxu0
  %v263 = vadd.f32 %v74, %v262
  %v264 = vpop.f32.mrb[0].mxu0
  %v265 = vpop.f32.mrb[0].mxu0
  %v266 = vadd.f32 %v74, %v265
  %v267 = vpop.f32.mrb[0].mxu0
  %268 = vmatprep.mubr.bf16.mxu0 0
  %269 = vmatmul.mubr.bf16.gmra.mrb[0].mxu0 %v142
  %v270 = vpop.f32.mrb[0].mxu0
  %v271 = vadd.f32 %v74, %v270
  %v272 = vpop.f32.mrb[0].mxu0
  %v273 = vpop.f32.mrb[0].mxu0
  %v274 = vadd.f32 %v74, %v273
  %v275 = vpop.f32.mrb[0].mxu0
  %276 = vmatprep.mubr.bf16.mxu0 0
  %277 = vmatmul.mubr.bf16.gmra.mrb[0].mxu0 %v143
  %v278 = vpop.f32.mrb[0].mxu0
  %v279 = vadd.f32 %v74, %v278
  %v280 = vpop.f32.mrb[0].mxu0
  %v281 = vpop.f32.mrb[0].mxu0
  %v282 = vadd.f32 %v74, %v281
  %v283 = vpop.f32.mrb[0].mxu0
  %284 = vmatprep.mubr.bf16.mxu0 0
  %285 = vmatmul.mubr.bf16.gmra.mrb[0].mxu0 %v144
  %v286 = vpop.f32.mrb[0].mxu0
  %v287 = vadd.f32 %v74, %v286
  %v288 = vpop.f32.mrb[0].mxu0
  %v289 = vpop.f32.mrb[0].mxu0
  %v290 = vadd.f32 %v74, %v289
  %v291 = vpop.f32.mrb[0].mxu0
  %292 = vmatprep.mubr.bf16.mxu0 0
  %293 = vmatmul.mubr.bf16.gmra.mrb[0].mxu0 %v145
  %v294 = vpop.f32.mrb[0].mxu0
  %v295 = vadd.f32 %v74, %v294
  %v296 = vpop.f32.mrb[0].mxu0
  %v297 = vpop.f32.mrb[0].mxu0
  %v298 = vadd.f32 %v74, %v297
  %v299 = vpop.f32.mrb[0].mxu0
  %300 = vmatprep.mubr.bf16.mxu0 0
  %301 = vmatmul.mubr.bf16.gmra.mrb[0].mxu0 %v146
  %v302 = vpop.f32.mrb[0].mxu0
  %v303 = vadd.f32 %v74, %v302
  %v304 = vpop.f32.mrb[0].mxu0
  %v305 = vpop.f32.mrb[0].mxu0
  %v306 = vadd.f32 %v74, %v305
  %v307 = vpop.f32.mrb[0].mxu0
  %308 = vmatprep.mubr.bf16.mxu0 0
  %309 = vmatmul.mubr.bf16.gmra.mrb[0].mxu0 %v147
  %v310 = vpop.f32.mrb[0].mxu0
  %v311 = vadd.f32 %v74, %v310
  %v312 = vpop.f32.mrb[0].mxu0
  %v313 = vpop.f32.mrb[0].mxu0
  %v314 = vadd.f32 %v74, %v313
  %v315 = vpop.f32.mrb[0].mxu0
  %316 = vmatprep.mubr.bf16.mxu0 0
  %317 = vmatmul.mubr.bf16.gmra.mrb[0].mxu0 %v148
  %v318 = vpop.f32.mrb[0].mxu0
  %v319 = vadd.f32 %v74, %v318
  %v320 = vpop.f32.mrb[0].mxu0
  %v321 = vpop.f32.mrb[0].mxu0
  %v322 = vadd.f32 %v74, %v321
  %v323 = vpop.f32.mrb[0].mxu0
  %324 = vmatprep.mubr.bf16.mxu0 0
  %325 = vmatmul.mubr.bf16.gmra.mrb[0].mxu0 %v149
  %v326 = vpop.f32.mrb[0].mxu0
  %v327 = vadd.f32 %v74, %v326
  %v328 = vpop.f32.mrb[0].mxu0
  %v329 = vpop.f32.mrb[0].mxu0
  %v330 = vadd.f32 %v74, %v329
  %v331 = vpop.f32.mrb[0].mxu0
  %332 = vmatprep.mubr.bf16.mxu0 0
  %333 = vmatmul.mubr.bf16.gmra.mrb[0].mxu0 %v150
  %v334 = vpop.f32.mrb[0].mxu0
  %v335 = vadd.f32 %v74, %v334
  %v336 = vpop.f32.mrb[0].mxu0
  %v337 = vpop.f32.mrb[0].mxu0
  %v338 = vadd.f32 %v74, %v337
  %v339 = vpop.f32.mrb[0].mxu0
  %340 = vmatprep.mubr.bf16.mxu0 0
  %341 = vmatmul.mubr.bf16.gmra.mrb[0].mxu0 %v151
  %v342 = vpop.f32.mrb[0].mxu0
  %v343 = vadd.f32 %v74, %v342
  %v344 = vpop.f32.mrb[0].mxu0
  %v345 = vpop.f32.mrb[0].mxu0
  %v346 = vadd.f32 %v74, %v345
  %v347 = vpop.f32.mrb[0].mxu0
  %348 = vmatprep.mubr.bf16.mxu0 0
  %349 = vmatmul.mubr.bf16.gmra.mrb[0].mxu0 %v152
  %v350 = vpop.f32.mrb[0].mxu0
  %v351 = vadd.f32 %v74, %v350
  %v352 = vpop.f32.mrb[0].mxu0
  %v353 = vpop.f32.mrb[0].mxu0
  %v354 = vadd.f32 %v74, %v353
  %v355 = vpop.f32.mrb[0].mxu0
  %356 = vmatprep.mubr.bf16.mxu0 0
  %357 = vmatmul.mubr.bf16.gmra.mrb[0].mxu0 %v153
  %v358 = vpop.f32.mrb[0].mxu0
  %v359 = vadd.f32 %v74, %v358
  %v360 = vpop.f32.mrb[0].mxu0
  %v361 = vpop.f32.mrb[0].mxu0
  %v362 = vadd.f32 %v74, %v361
  %v363 = vpop.f32.mrb[0].mxu0
  %364 = vmatprep.mubr.bf16.mxu0 0
  %365 = vmatmul.mubr.bf16.gmra.mrb[0].mxu0 %v154
  %v366 = vpop.f32.mrb[0].mxu0
  %v367 = vadd.f32 %v74, %v366
  %v368 = vpop.f32.mrb[0].mxu0
  %v369 = vpop.f32.mrb[0].mxu0
  %v370 = vadd.f32 %v74, %v369
  %v371 = vpop.f32.mrb[0].mxu0
  %372 = vmatprep.mubr.bf16.mxu0 0
  %373 = vmatmul.mubr.bf16.gmra.mrb[0].mxu0 %v155
  %v374 = vpop.f32.mrb[0].mxu0
  %v375 = vadd.f32 %v74, %v374
  %v376 = vpop.f32.mrb[0].mxu0
  %v377 = vpop.f32.mrb[0].mxu0
  %v378 = vadd.f32 %v74, %v377
  %v379 = vpop.f32.mrb[0].mxu0
  %380 = vdwg.mxu0
  %vm381 = vcmp.gt.f32.partialorder %v255, 0.0
  %vm382 = vcmp.gt.f32.partialorder %v258, 0.0
  %vm383 = vcmp.gt.f32.partialorder %v263, 0.0
  %vm384 = vcmp.gt.f32.partialorder %v266, 0.0
  %vm385 = vcmp.gt.f32.partialorder %v271, 0.0
  %vm386 = vcmp.gt.f32.partialorder %v274, 0.0
  %vm387 = vcmp.gt.f32.partialorder %v279, 0.0
  %vm388 = vcmp.gt.f32.partialorder %v282, 0.0
  %vm389 = vcmp.gt.f32.partialorder %v287, 0.0
  %vm390 = vcmp.gt.f32.partialorder %v290, 0.0
  %vm391 = vcmp.gt.f32.partialorder %v295, 0.0
  %vm392 = vcmp.gt.f32.partialorder %v298, 0.0
  %vm393 = vcmp.gt.f32.partialorder %v303, 0.0
  %vm394 = vcmp.gt.f32.partialorder %v306, 0.0
  %vm395 = vcmp.gt.f32.partialorder %v311, 0.0
  %vm396 = vcmp.gt.f32.partialorder %v314, 0.0
  %vm397 = vcmp.gt.f32.partialorder %v319, 0.0
  %vm398 = vcmp.gt.f32.partialorder %v322, 0.0
  %vm399 = vcmp.gt.f32.partialorder %v327, 0.0
  %vm400 = vcmp.gt.f32.partialorder %v330, 0.0
  %vm401 = vcmp.gt.f32.partialorder %v335, 0.0
  %vm402 = vcmp.gt.f32.partialorder %v338, 0.0
  %vm403 = vcmp.gt.f32.partialorder %v343, 0.0
  %vm404 = vcmp.gt.f32.partialorder %v346, 0.0
  %vm405 = vcmp.gt.f32.partialorder %v351, 0.0
  %vm406 = vcmp.gt.f32.partialorder %v354, 0.0
  %vm407 = vcmp.gt.f32.partialorder %v359, 0.0
  %vm408 = vcmp.gt.f32.partialorder %v362, 0.0
  %vm409 = vcmp.gt.f32.partialorder %v367, 0.0
  %vm410 = vcmp.gt.f32.partialorder %v370, 0.0
  %vm411 = vcmp.gt.f32.partialorder %v375, 0.0
  %vm412 = vcmp.gt.f32.partialorder %v378, 0.0
  %v413 = vmul.f32 %v255, 0.2
  %v414 = vmul.f32 %v258, 0.2
  %v415 = vmul.f32 %v263, 0.2
  %v416 = vmul.f32 %v266, 0.2
  %v417 = vmul.f32 %v271, 0.2
  %v418 = vmul.f32 %v274, 0.2
  %v419 = vmul.f32 %v279, 0.2
  %v420 = vmul.f32 %v282, 0.2
  %v421 = vmul.f32 %v287, 0.2
  %v422 = vmul.f32 %v290, 0.2
  %v423 = vmul.f32 %v295, 0.2
  %v424 = vmul.f32 %v298, 0.2
  %v425 = vmul.f32 %v303, 0.2
  %v426 = vmul.f32 %v306, 0.2
  %v427 = vmul.f32 %v311, 0.2
  %v428 = vmul.f32 %v314, 0.2
  %v429 = vmul.f32 %v319, 0.2
  %v430 = vmul.f32 %v322, 0.2
  %v431 = vmul.f32 %v327, 0.2
  %v432 = vmul.f32 %v330, 0.2
  %v433 = vmul.f32 %v335, 0.2
  %v434 = vmul.f32 %v338, 0.2
  %v435 = vmul.f32 %v343, 0.2
  %v436 = vmul.f32 %v346, 0.2
  %v437 = vmul.f32 %v351, 0.2
  %v438 = vmul.f32 %v354, 0.2
  %v439 = vmul.f32 %v359, 0.2
  %v440 = vmul.f32 %v362, 0.2
  %v441 = vmul.f32 %v367, 0.2
  %v442 = vmul.f32 %v370, 0.2
  %v443 = vmul.f32 %v375, 0.2
  %v444 = vmul.f32 %v378, 0.2
  %v445 = vsel %vm381, %v255, %v413
  %v446 = vsel %vm382, %v258, %v414
  %v447 = vsel %vm383, %v263, %v415
  %v448 = vsel %vm384, %v266, %v416
  %v449 = vsel %vm385, %v271, %v417
  %v450 = vsel %vm386, %v274, %v418
  %v451 = vsel %vm387, %v279, %v419
  %v452 = vsel %vm388, %v282, %v420
  %v453 = vsel %vm389, %v287, %v421
  %v454 = vsel %vm390, %v290, %v422
  %v455 = vsel %vm391, %v295, %v423
  %v456 = vsel %vm392, %v298, %v424
  %v457 = vsel %vm393, %v303, %v425
  %v458 = vsel %vm394, %v306, %v426
  %v459 = vsel %vm395, %v311, %v427
  %v460 = vsel %vm396, %v314, %v428
  %v461 = vsel %vm397, %v319, %v429
  %v462 = vsel %vm398, %v322, %v430
  %v463 = vsel %vm399, %v327, %v431
  %v464 = vsel %vm400, %v330, %v432
  %v465 = vsel %vm401, %v335, %v433
  %v466 = vsel %vm402, %v338, %v434
  %v467 = vsel %vm403, %v343, %v435
  %v468 = vsel %vm404, %v346, %v436
  %v469 = vsel %vm405, %v351, %v437
  %v470 = vsel %vm406, %v354, %v438
  %v471 = vsel %vm407, %v359, %v439
  %v472 = vsel %vm408, %v362, %v440
  %v473 = vsel %vm409, %v367, %v441
  %v474 = vsel %vm410, %v370, %v442
  %v475 = vsel %vm411, %v375, %v443
  %v476 = vsel %vm412, %v378, %v444
  %v477 = vpack.c.bf16 %v446, %v445
  %v478 = vpack.c.bf16 %v448, %v447
  %v479 = vpack.c.bf16 %v450, %v449
  %v480 = vpack.c.bf16 %v452, %v451
  %v481 = vpack.c.bf16 %v454, %v453
  %v482 = vpack.c.bf16 %v456, %v455
  %v483 = vpack.c.bf16 %v458, %v457
  %v484 = vpack.c.bf16 %v460, %v459
  %v485 = vpack.c.bf16 %v462, %v461
  %v486 = vpack.c.bf16 %v464, %v463
  %v487 = vpack.c.bf16 %v466, %v465
  %v488 = vpack.c.bf16 %v468, %v467
  %v489 = vpack.c.bf16 %v470, %v469
  %v490 = vpack.c.bf16 %v472, %v471
  %v491 = vpack.c.bf16 %v474, %v473
  %v492 = vpack.c.bf16 %v476, %v475
  %v493 = vld [vmem:[%s3] sm:$0xf]
  %v494 = vld [vmem:[%s3 + $0x4] sm:$0xf]
  %v495 = vld [vmem:[%s3 + $0x8] sm:$0xf]
  %v496 = vld [vmem:[%s3 + $0xc] sm:$0xf]
  %v497 = vld [vmem:[%s3 + $0x10] sm:$0xf]
  %v498 = vld [vmem:[%s3 + $0x14] sm:$0xf]
  %v499 = vld [vmem:[%s3 + $0x18] sm:$0xf]
  %v500 = vld [vmem:[%s3 + $0x1c] sm:$0xf]
  %v501 = vld [vmem:[%s3 + $0x20] sm:$0xf]
  %v502 = vld [vmem:[%s3 + $0x24] sm:$0xf]
  %v503 = vld [vmem:[%s3 + $0x28] sm:$0xf]
  %v504 = vld [vmem:[%s3 + $0x2c] sm:$0xf]
  %v505 = vld [vmem:[%s3 + $0x30] sm:$0xf]
  %v506 = vld [vmem:[%s3 + $0x34] sm:$0xf]
  %v507 = vld [vmem:[%s3 + $0x38] sm:$0xf]
  %v508 = vld [vmem:[%s3 + $0x3c] sm:$0xf]
  %v509 = vld [vmem:[%s4] sm:$0x1]
  %v511 = vlaneseq
  %v512 = vshrl.u32 %v511, 7
  %v513 = vsub.s32 0, %v512
  %v514 = vrot.slane %v509, %v513
  %v532 = vunpack.c.l.b16 %v493
  %v533 = vunpack.c.l.b16 %v494
  %v534 = vunpack.c.l.b16 %v495
  %v535 = vunpack.c.l.b16 %v496
  %v536 = vunpack.c.l.b16 %v497
  %v537 = vunpack.c.l.b16 %v498
  %v538 = vunpack.c.l.b16 %v499
  %v539 = vunpack.c.l.b16 %v500
  %v540 = vunpack.c.l.b16 %v501
  %v541 = vunpack.c.l.b16 %v502
  %v542 = vunpack.c.l.b16 %v503
  %v543 = vunpack.c.l.b16 %v504
  %v544 = vunpack.c.l.b16 %v505
  %v545 = vunpack.c.l.b16 %v506
  %v546 = vunpack.c.l.b16 %v507
  %v547 = vunpack.c.l.b16 %v508
  %v548 = vpack.c.b16 %v533, %v532
  %v549 = vpack.c.b16 %v535, %v534
  %v550 = vpack.c.b16 %v537, %v536
  %v551 = vpack.c.b16 %v539, %v538
  %v552 = vpack.c.b16 %v541, %v540
  %v553 = vpack.c.b16 %v543, %v542
  %v554 = vpack.c.b16 %v545, %v544
  %v555 = vpack.c.b16 %v547, %v546
  %564 = vmatprep.subr.bf16.mxu0 0
  %565 = vmatpush1.bf16.msra.mxu0 %v548
  %566 = vmatprep.subr.bf16.mxu0 0
  %567 = vmatpush1.bf16.msra.mxu0 %v549
  %568 = vmatprep.subr.bf16.mxu0 0
  %569 = vmatpush1.bf16.msra.mxu0 %v550
  %570 = vmatprep.subr.bf16.mxu0 0
  %571 = vmatpush1.bf16.msra.mxu0 %v551
  %572 = vmatprep.subr.bf16.mxu0 0
  %573 = vmatpush1.bf16.msra.mxu0 %v552
  %574 = vmatprep.subr.bf16.mxu0 0
  %575 = vmatpush1.bf16.msra.mxu0 %v553
  %576 = vmatprep.subr.bf16.mxu0 0
  %577 = vmatpush1.bf16.msra.mxu0 %v554
  %578 = vmatprep.subr.bf16.mxu0 0
  %579 = vmatpush1.bf16.msra.mxu0 %v555
  %580 = vmatprep.subr.bf16.mxu0 0
  %581 = vmatpush1.bf16.msra.mxu0 0
  %582 = vmatprep.subr.bf16.mxu0 0
  %583 = vmatpush1.bf16.msra.mxu0 0
  %584 = vmatprep.subr.bf16.mxu0 0
  %585 = vmatpush1.bf16.msra.mxu0 0
  %586 = vmatprep.subr.bf16.mxu0 0
  %587 = vmatpush1.bf16.msra.mxu0 0
  %588 = vmatprep.subr.bf16.mxu0 0
  %589 = vmatpush1.bf16.msra.mxu0 0
  %590 = vmatprep.subr.bf16.mxu0 0
  %591 = vmatpush1.bf16.msra.mxu0 0
  %592 = vmatprep.subr.bf16.mxu0 0
  %593 = vmatpush1.bf16.msra.mxu0 0
  %594 = vmatprep.subr.bf16.mxu0 0
  %595 = vmatpush1.bf16.msra.mxu0 0
  %596 = vmatprep.mubr.bf16.mxu0 0
  %597 = vmatmul.mubr.bf16.gmra.mrb[0].mxu0 %v477
  %v598 = vpop.f32.mrb[0].mxu0
  %v599 = vadd.f32 %v514, %v598
  %v600 = vpop.f32.mrb[0].mxu0
  %v601 = vpop.f32.mrb[0].mxu0
  %v602 = vadd.f32 %v514, %v601
  %v603 = vpop.f32.mrb[0].mxu0
  %604 = vmatprep.mubr.bf16.mxu0 0
  %605 = vmatmul.mubr.bf16.gmra.mrb[0].mxu0 %v478
  %v606 = vpop.f32.mrb[0].mxu0
  %v607 = vadd.f32 %v514, %v606
  %v608 = vpop.f32.mrb[0].mxu0
  %v609 = vpop.f32.mrb[0].mxu0
  %v610 = vadd.f32 %v514, %v609
  %v611 = vpop.f32.mrb[0].mxu0
  %612 = vmatprep.mubr.bf16.mxu0 0
  %613 = vmatmul.mubr.bf16.gmra.mrb[0].mxu0 %v479
  %v614 = vpop.f32.mrb[0].mxu0
  %v615 = vadd.f32 %v514, %v614
  %v616 = vpop.f32.mrb[0].mxu0
  %v617 = vpop.f32.mrb[0].mxu0
  %v618 = vadd.f32 %v514, %v617
  %v619 = vpop.f32.mrb[0].mxu0
  %620 = vmatprep.mubr.bf16.mxu0 0
  %621 = vmatmul.mubr.bf16.gmra.mrb[0].mxu0 %v480
  %v622 = vpop.f32.mrb[0].mxu0
  %v623 = vadd.f32 %v514, %v622
  %v624 = vpop.f32.mrb[0].mxu0
  %v625 = vpop.f32.mrb[0].mxu0
  %v626 = vadd.f32 %v514, %v625
  %v627 = vpop.f32.mrb[0].mxu0
  %628 = vmatprep.mubr.bf16.mxu0 0
  %629 = vmatmul.mubr.bf16.gmra.mrb[0].mxu0 %v481
  %v630 = vpop.f32.mrb[0].mxu0
  %v631 = vadd.f32 %v514, %v630
  %v632 = vpop.f32.mrb[0].mxu0
  %v633 = vpop.f32.mrb[0].mxu0
  %v634 = vadd.f32 %v514, %v633
  %v635 = vpop.f32.mrb[0].mxu0
  %636 = vmatprep.mubr.bf16.mxu0 0
  %637 = vmatmul.mubr.bf16.gmra.mrb[0].mxu0 %v482
  %v638 = vpop.f32.mrb[0].mxu0
  %v639 = vadd.f32 %v514, %v638
  %v640 = vpop.f32.mrb[0].mxu0
  %v641 = vpop.f32.mrb[0].mxu0
  %v642 = vadd.f32 %v514, %v641
  %v643 = vpop.f32.mrb[0].mxu0
  %644 = vmatprep.mubr.bf16.mxu0 0
  %645 = vmatmul.mubr.bf16.gmra.mrb[0].mxu0 %v483
  %v646 = vpop.f32.mrb[0].mxu0
  %v647 = vadd.f32 %v514, %v646
  %v648 = vpop.f32.mrb[0].mxu0
  %v649 = vpop.f32.mrb[0].mxu0
  %v650 = vadd.f32 %v514, %v649
  %v651 = vpop.f32.mrb[0].mxu0
  %652 = vmatprep.mubr.bf16.mxu0 0
  %653 = vmatmul.mubr.bf16.gmra.mrb[0].mxu0 %v484
  %v654 = vpop.f32.mrb[0].mxu0
  %v655 = vadd.f32 %v514, %v654
  %v656 = vpop.f32.mrb[0].mxu0
  %v657 = vpop.f32.mrb[0].mxu0
  %v658 = vadd.f32 %v514, %v657
  %v659 = vpop.f32.mrb[0].mxu0
  %660 = vmatprep.mubr.bf16.mxu0 0
  %661 = vmatmul.mubr.bf16.gmra.mrb[0].mxu0 %v485
  %v662 = vpop.f32.mrb[0].mxu0
  %v663 = vadd.f32 %v514, %v662
  %v664 = vpop.f32.mrb[0].mxu0
  %v665 = vpop.f32.mrb[0].mxu0
  %v666 = vadd.f32 %v514, %v665
  %v667 = vpop.f32.mrb[0].mxu0
  %668 = vmatprep.mubr.bf16.mxu0 0
  %669 = vmatmul.mubr.bf16.gmra.mrb[0].mxu0 %v486
  %v670 = vpop.f32.mrb[0].mxu0
  %v671 = vadd.f32 %v514, %v670
  %v672 = vpop.f32.mrb[0].mxu0
  %v673 = vpop.f32.mrb[0].mxu0
  %v674 = vadd.f32 %v514, %v673
  %v675 = vpop.f32.mrb[0].mxu0
  %676 = vmatprep.mubr.bf16.mxu0 0
  %677 = vmatmul.mubr.bf16.gmra.mrb[0].mxu0 %v487
  %v678 = vpop.f32.mrb[0].mxu0
  %v679 = vadd.f32 %v514, %v678
  %v680 = vpop.f32.mrb[0].mxu0
  %v681 = vpop.f32.mrb[0].mxu0
  %v682 = vadd.f32 %v514, %v681
  %v683 = vpop.f32.mrb[0].mxu0
  %684 = vmatprep.mubr.bf16.mxu0 0
  %685 = vmatmul.mubr.bf16.gmra.mrb[0].mxu0 %v488
  %v686 = vpop.f32.mrb[0].mxu0
  %v687 = vadd.f32 %v514, %v686
  %v688 = vpop.f32.mrb[0].mxu0
  %v689 = vpop.f32.mrb[0].mxu0
  %v690 = vadd.f32 %v514, %v689
  %v691 = vpop.f32.mrb[0].mxu0
  %692 = vmatprep.mubr.bf16.mxu0 0
  %693 = vmatmul.mubr.bf16.gmra.mrb[0].mxu0 %v489
  %v694 = vpop.f32.mrb[0].mxu0
  %v695 = vadd.f32 %v514, %v694
  %v696 = vpop.f32.mrb[0].mxu0
  %v697 = vpop.f32.mrb[0].mxu0
  %v698 = vadd.f32 %v514, %v697
  %v699 = vpop.f32.mrb[0].mxu0
  %700 = vmatprep.mubr.bf16.mxu0 0
  %701 = vmatmul.mubr.bf16.gmra.mrb[0].mxu0 %v490
  %v702 = vpop.f32.mrb[0].mxu0
  %v703 = vadd.f32 %v514, %v702
  %v704 = vpop.f32.mrb[0].mxu0
  %v705 = vpop.f32.mrb[0].mxu0
  %v706 = vadd.f32 %v514, %v705
  %v707 = vpop.f32.mrb[0].mxu0
  %708 = vmatprep.mubr.bf16.mxu0 0
  %709 = vmatmul.mubr.bf16.gmra.mrb[0].mxu0 %v491
  %v710 = vpop.f32.mrb[0].mxu0
  %v711 = vadd.f32 %v514, %v710
  %v712 = vpop.f32.mrb[0].mxu0
  %v713 = vpop.f32.mrb[0].mxu0
  %v714 = vadd.f32 %v514, %v713
  %v715 = vpop.f32.mrb[0].mxu0
  %716 = vmatprep.mubr.bf16.mxu0 0
  %717 = vmatmul.mubr.bf16.gmra.mrb[0].mxu0 %v492
  %v718 = vpop.f32.mrb[0].mxu0
  %v719 = vadd.f32 %v514, %v718
  %v720 = vpop.f32.mrb[0].mxu0
  %v721 = vpop.f32.mrb[0].mxu0
  %v722 = vadd.f32 %v514, %v721
  %v723 = vpop.f32.mrb[0].mxu0
  %724 = vdwg.mxu0
  %vm725 = vcmp.gt.f32.partialorder %v599, 0.0
  %vm726 = vcmp.gt.f32.partialorder %v602, 0.0
  %vm727 = vcmp.gt.f32.partialorder %v607, 0.0
  %vm728 = vcmp.gt.f32.partialorder %v610, 0.0
  %vm729 = vcmp.gt.f32.partialorder %v615, 0.0
  %vm730 = vcmp.gt.f32.partialorder %v618, 0.0
  %vm731 = vcmp.gt.f32.partialorder %v623, 0.0
  %vm732 = vcmp.gt.f32.partialorder %v626, 0.0
  %vm733 = vcmp.gt.f32.partialorder %v631, 0.0
  %vm734 = vcmp.gt.f32.partialorder %v634, 0.0
  %vm735 = vcmp.gt.f32.partialorder %v639, 0.0
  %vm736 = vcmp.gt.f32.partialorder %v642, 0.0
  %vm737 = vcmp.gt.f32.partialorder %v647, 0.0
  %vm738 = vcmp.gt.f32.partialorder %v650, 0.0
  %vm739 = vcmp.gt.f32.partialorder %v655, 0.0
  %vm740 = vcmp.gt.f32.partialorder %v658, 0.0
  %vm741 = vcmp.gt.f32.partialorder %v663, 0.0
  %vm742 = vcmp.gt.f32.partialorder %v666, 0.0
  %vm743 = vcmp.gt.f32.partialorder %v671, 0.0
  %vm744 = vcmp.gt.f32.partialorder %v674, 0.0
  %vm745 = vcmp.gt.f32.partialorder %v679, 0.0
  %vm746 = vcmp.gt.f32.partialorder %v682, 0.0
  %vm747 = vcmp.gt.f32.partialorder %v687, 0.0
  %vm748 = vcmp.gt.f32.partialorder %v690, 0.0
  %vm749 = vcmp.gt.f32.partialorder %v695, 0.0
  %vm750 = vcmp.gt.f32.partialorder %v698, 0.0
  %vm751 = vcmp.gt.f32.partialorder %v703, 0.0
  %vm752 = vcmp.gt.f32.partialorder %v706, 0.0
  %vm753 = vcmp.gt.f32.partialorder %v711, 0.0
  %vm754 = vcmp.gt.f32.partialorder %v714, 0.0
  %vm755 = vcmp.gt.f32.partialorder %v719, 0.0
  %vm756 = vcmp.gt.f32.partialorder %v722, 0.0
  %v757 = vmul.f32 %v599, 0.2
  %v758 = vmul.f32 %v602, 0.2
  %v759 = vmul.f32 %v607, 0.2
  %v760 = vmul.f32 %v610, 0.2
  %v761 = vmul.f32 %v615, 0.2
  %v762 = vmul.f32 %v618, 0.2
  %v763 = vmul.f32 %v623, 0.2
  %v764 = vmul.f32 %v626, 0.2
  %v765 = vmul.f32 %v631, 0.2
  %v766 = vmul.f32 %v634, 0.2
  %v767 = vmul.f32 %v639, 0.2
  %v768 = vmul.f32 %v642, 0.2
  %v769 = vmul.f32 %v647, 0.2
  %v770 = vmul.f32 %v650, 0.2
  %v771 = vmul.f32 %v655, 0.2
  %v772 = vmul.f32 %v658, 0.2
  %v773 = vmul.f32 %v663, 0.2
  %v774 = vmul.f32 %v666, 0.2
  %v775 = vmul.f32 %v671, 0.2
  %v776 = vmul.f32 %v674, 0.2
  %v777 = vmul.f32 %v679, 0.2
  %v778 = vmul.f32 %v682, 0.2
  %v779 = vmul.f32 %v687, 0.2
  %v780 = vmul.f32 %v690, 0.2
  %v781 = vmul.f32 %v695, 0.2
  %v782 = vmul.f32 %v698, 0.2
  %v783 = vmul.f32 %v703, 0.2
  %v784 = vmul.f32 %v706, 0.2
  %v785 = vmul.f32 %v711, 0.2
  %v786 = vmul.f32 %v714, 0.2
  %v787 = vmul.f32 %v719, 0.2
  %v788 = vmul.f32 %v722, 0.2
  %v789 = vsel %vm725, %v599, %v757
  %v790 = vsel %vm726, %v602, %v758
  %v791 = vsel %vm727, %v607, %v759
  %v792 = vsel %vm728, %v610, %v760
  %v793 = vsel %vm729, %v615, %v761
  %v794 = vsel %vm730, %v618, %v762
  %v795 = vsel %vm731, %v623, %v763
  %v796 = vsel %vm732, %v626, %v764
  %v797 = vsel %vm733, %v631, %v765
  %v798 = vsel %vm734, %v634, %v766
  %v799 = vsel %vm735, %v639, %v767
  %v800 = vsel %vm736, %v642, %v768
  %v801 = vsel %vm737, %v647, %v769
  %v802 = vsel %vm738, %v650, %v770
  %v803 = vsel %vm739, %v655, %v771
  %v804 = vsel %vm740, %v658, %v772
  %v805 = vsel %vm741, %v663, %v773
  %v806 = vsel %vm742, %v666, %v774
  %v807 = vsel %vm743, %v671, %v775
  %v808 = vsel %vm744, %v674, %v776
  %v809 = vsel %vm745, %v679, %v777
  %v810 = vsel %vm746, %v682, %v778
  %v811 = vsel %vm747, %v687, %v779
  %v812 = vsel %vm748, %v690, %v780
  %v813 = vsel %vm749, %v695, %v781
  %v814 = vsel %vm750, %v698, %v782
  %v815 = vsel %vm751, %v703, %v783
  %v816 = vsel %vm752, %v706, %v784
  %v817 = vsel %vm753, %v711, %v785
  %v818 = vsel %vm754, %v714, %v786
  %v819 = vsel %vm755, %v719, %v787
  %v820 = vsel %vm756, %v722, %v788
  %821 = vst [vmem:[%s5] sm:$0xff] %v789
  %822 = vst [vmem:[%s5 + $0x8] sm:$0xff] %v790
  %823 = vst [vmem:[%s5 + $0x10] sm:$0xff] %v791
  %824 = vst [vmem:[%s5 + $0x18] sm:$0xff] %v792
  %825 = vst [vmem:[%s5 + $0x20] sm:$0xff] %v793
  %826 = vst [vmem:[%s5 + $0x28] sm:$0xff] %v794
  %827 = vst [vmem:[%s5 + $0x30] sm:$0xff] %v795
  %828 = vst [vmem:[%s5 + $0x38] sm:$0xff] %v796
  %829 = vst [vmem:[%s5 + $0x40] sm:$0xff] %v797
  %830 = vst [vmem:[%s5 + $0x48] sm:$0xff] %v798
  %831 = vst [vmem:[%s5 + $0x50] sm:$0xff] %v799
  %832 = vst [vmem:[%s5 + $0x58] sm:$0xff] %v800
  %833 = vst [vmem:[%s5 + $0x60] sm:$0xff] %v801
  %834 = vst [vmem:[%s5 + $0x68] sm:$0xff] %v802
  %835 = vst [vmem:[%s5 + $0x70] sm:$0xff] %v803
  %836 = vst [vmem:[%s5 + $0x78] sm:$0xff] %v804
  %837 = vst [vmem:[%s5 + $0x80] sm:$0xff] %v805
  %838 = vst [vmem:[%s5 + $0x88] sm:$0xff] %v806
  %839 = vst [vmem:[%s5 + $0x90] sm:$0xff] %v807
  %840 = vst [vmem:[%s5 + $0x98] sm:$0xff] %v808
  %841 = vst [vmem:[%s5 + $0xa0] sm:$0xff] %v809
  %842 = vst [vmem:[%s5 + $0xa8] sm:$0xff] %v810
  %843 = vst [vmem:[%s5 + $0xb0] sm:$0xff] %v811
  %844 = vst [vmem:[%s5 + $0xb8] sm:$0xff] %v812
  %845 = vst [vmem:[%s5 + $0xc0] sm:$0xff] %v813
  %846 = vst [vmem:[%s5 + $0xc8] sm:$0xff] %v814
  %847 = vst [vmem:[%s5 + $0xd0] sm:$0xff] %v815
  %848 = vst [vmem:[%s5 + $0xd8] sm:$0xff] %v816
  %849 = vst [vmem:[%s5 + $0xe0] sm:$0xff] %v817
  %850 = vst [vmem:[%s5 + $0xe8] sm:$0xff] %v818
  %851 = vst [vmem:[%s5 + $0xf0] sm:$0xff] %v819
  %852 = vst [vmem:[%s5 + $0xf8] sm:$0xff] %v820
  // Predicated region
  $region22: #{feedback_forward_prepared.1} parent=0 // pred_check
    _
  $region23: #{feedback_forward_prepared.1} parent=0 // pred_check_branch
    %854 = sbr.rel (0) target = $region25
  $region24: #{feedback_forward_prepared.1} parent=0 // pred_region
    _
  $region25: #{feedback_forward_prepared.1} parent=0 // pred_fallthru
    _
  // Predicated region
  $region26: #{feedback_forward_prepared.1} parent=0 // pred_check
    _
  $region27: #{feedback_forward_prepared.1} parent=0 // pred_check_branch
    %856 = sbr.rel (0) target = $region29
  $region28: #{feedback_forward_prepared.1} parent=0 // pred_region
    _
  $region29: #{feedback_forward_prepared.1} parent=0 // pred_fallthru
    _

</llo_original>
